<compile_context>
chip_gen: v5e
topology: v5e:2x2
jax: 0.10.0
libtpu: 0.0.40
codegen_flags: <defaults>
</compile_context>

<pallas_src>
import jax
import jax.numpy as jnp
from jax.experimental import pallas as pl
from jax.experimental.pallas import tpu as pltpu

LEAKY_SLOPE = 0.01   # PyTorch F.leaky_relu default
BN_EPS = 1e-5        # PyTorch BatchNorm1d default

LANE = 128
MAX_TIME_TILE = 32768                    # sweep cap from perf review (8K-32K)
VMEM_TILE_BUDGET = 20 * 1024 * 1024      # per-step footprint target (headroom on v5e/v7x)
VMEM_LIMIT_BYTES = 48 * 1024 * 1024      # raised scoped-VMEM limit; < v7x 64 MiB physical


def _leaky_relu(x):
    return jnp.where(x > 0, x, LEAKY_SLOPE * x)


def _round_up(n, m):
    return ((n + m - 1) // m) * m


def _choose_time_tiling(B, F, H, O, T):
    """Pick a lane-dense time tile (multiple of 128) and the time-tile count.

    Maximizes the tile subject to a VMEM budget (double-buffered x/out tiles + generous
    allowance for the Mosaic-internal (H, tt) f32 intermediates) and guarantees >=2
    'parallel' grid steps when possible so v7x's two TensorCores both get work.
    """
    t128 = _round_up(max(T, 1), LANE)
    f_pad = max(_round_up(F, 8), 8)
    h_pad = max(_round_up(H, 8), 8)
    o_pad = max(_round_up(O, 8), 8)
    # bytes per lane-column: 2x double-buffered f32 x/out tiles + ~4 (H, tt) f32 intermediates
    bytes_per_col = 4 * (2 * f_pad + 2 * o_pad + 4 * h_pad)
    tt_budget = max(LANE, (VMEM_TILE_BUDGET // bytes_per_col) // LANE * LANE)
    tt = min(t128, MAX_TIME_TILE, tt_budget)
    nt = -(-t128 // tt)
    if B * nt < 2 and t128 >= 2 * LANE:
        nt = 2                                   # give the second TensorCore (v7x) work
    tt = _round_up(-(-T // nt), LANE)            # even-ish, 128-aligned split
    nt = -(-T // tt)
    return tt, nt, nt * tt


def _fas_kernel(x_ref, w0_ref, b0_ref, w1_ref, b1_ref, w2_ref, b2_ref, out_ref):
    """One (batch, time-tile) grid step.

    x_ref  : (1, F, tt)  f32 input slab, time on lanes
    w0,b0  : (H, F) bf16, (H, 1) f32   BN-folded input conv (effective weight/bias)
    w1,b1  : (H, H) bf16, (H, 1) f32   intermediate conv
    w2,b2  : (O, H) bf16, (O, 1) f32   output conv
    out_ref: (1, O, tt)
    """
    x = x_ref[0].astype(jnp.bfloat16)                       # bf16 MXU operands, f32 accumulate

    h = jnp.dot(w0_ref[...], x, preferred_element_type=jnp.float32) + b0_ref[...]
    h = _leaky_relu(h).astype(jnp.bfloat16)

    h = jnp.dot(w1_ref[...], h, preferred_element_type=jnp.float32) + b1_ref[...]
    h = _leaky_relu(h).astype(jnp.bfloat16)

    y = jnp.dot(w2_ref[...], h, preferred_element_type=jnp.float32) + b2_ref[...]
    out_ref[0] = y.astype(out_ref.dtype)


def feature_aggregation_stack(x, params):
    """x: (B, F, T) float32 (NCT, PyTorch layout). Returns (B, O, T) float32."""
    gamma, beta, w0, w1, b1, w2, b2 = params
    B, F, T = x.shape
    H = w0.shape[0]
    O = w2.shape[0]

    xf = x.astype(jnp.float32)

    # ---- BatchNorm1d training-mode stats (per feature, over batch x time), fused single pass:
    #      E[x] and E[x^2] reduced together (one HBM read), var = E[x^2] - E[x]^2 (biased). ----
    mean = jnp.mean(xf, axis=(0, 2))
    mean_sq = jnp.mean(xf * xf, axis=(0, 2))
    var = jnp.maximum(mean_sq - mean * mean, 0.0)               # clamp vs. cancellation
    scale = gamma.astype(jnp.float32) * jax.lax.rsqrt(var + BN_EPS)   # (F,)
    shift = beta.astype(jnp.float32) - scale * mean                   # (F,)

    # Fold BN into the first conv: (w0*scale) @ x + w0 @ shift == w0 @ (scale*x + shift).
    w0_eff = (w0.astype(jnp.float32) * scale[None, :]).astype(jnp.bfloat16)   # (H, F) bf16
    b0_eff = (w0.astype(jnp.float32) @ shift)[:, None]                        # (H, 1) f32
    w1_b = w1.astype(jnp.bfloat16)                                            # (H, H) bf16
    w2_b = w2.astype(jnp.bfloat16)                                            # (O, H) bf16
    b1_c = b1.astype(jnp.float32)[:, None]                                    # (H, 1)
    b2_c = b2.astype(jnp.float32)[:, None]                                    # (O, 1)

    tt, nt, T_pad = _choose_time_tiling(B, F, H, O, T)
    if T_pad != T:
        xf = jnp.pad(xf, ((0, 0), (0, 0), (0, T_pad - T)))       # lane-align time

    grid = (B, nt)
    const = lambda b, t: (0, 0)      # weights/biases stay VMEM-resident across the whole grid

    cost = pl.CostEstimate(
        flops=2 * B * T_pad * (H * F + H * H + O * H),
        transcendentals=0,
        bytes_accessed=4 * B * T_pad * (F + O)
        + 2 * (H * F + H * H + O * H) + 4 * (2 * H + O),
    )

    out = pl.pallas_call(
        _fas_kernel,
        out_shape=jax.ShapeDtypeStruct((B, O, T_pad), x.dtype),
        grid=grid,
        in_specs=[
            pl.BlockSpec((1, F, tt), lambda b, t: (b, 0, t)),
            pl.BlockSpec((H, F), const),
            pl.BlockSpec((H, 1), const),
            pl.BlockSpec((H, H), const),
            pl.BlockSpec((H, 1), const),
            pl.BlockSpec((O, H), const),
            pl.BlockSpec((O, 1), const),
        ],
        out_specs=pl.BlockSpec((1, O, tt), lambda b, t: (b, 0, t)),
        compiler_params=pltpu.CompilerParams(
            dimension_semantics=("parallel", "parallel"),
            vmem_limit_bytes=VMEM_LIMIT_BYTES,
        ),
        cost_estimate=cost,
    )(xf, w0_eff, b0_eff, w1_b, b1_c, w2_b, b2_c)

    return out[:, :, :T] if T_pad != T else out


def _reference(x, params):
    """Plain-JAX f32 reference of the PyTorch forward (training-mode BN + convs + leaky_relu)."""
    gamma, beta, w0, w1, b1, w2, b2 = params
    mean = jnp.mean(x, axis=(0, 2))
    var = jnp.mean(jnp.square(x - mean[None, :, None]), axis=(0, 2))
    xb = ((x - mean[None, :, None]) * jax.lax.rsqrt(var + BN_EPS)[None, :, None]
          * gamma[None, :, None] + beta[None, :, None])
    h = _leaky_relu(jnp.einsum('hf,bft->bht', w0, xb))
    h = _leaky_relu(jnp.einsum('gh,bht->bgt', w1, h) + b1[None, :, None])
    y = jnp.einsum('oh,bht->bot', w2, h) + b2[None, :, None]
    return y


def init_params(key, no_features, no_out_features, no_intermediate_features):
    """Deterministic synthetic init, PyTorch Conv1d shapes (out, in) with kernel_size=1 squeezed."""
    ks = jax.random.split(key, 6)
    F, H, O = no_features, no_intermediate_features, no_out_features
    gamma = jnp.ones((F,), jnp.float32)                         # BN weight init = 1
    beta = jnp.zeros((F,), jnp.float32)                         # BN bias init = 0
    w0 = jax.random.normal(ks[0], (H, F), jnp.float32) * 0.2    # input conv, bias=False
    w1 = jax.random.normal(ks[1], (H, H), jnp.float32) * 0.2    # intermediate conv
    b1 = jax.random.normal(ks[2], (H,), jnp.float32) * 0.1
    w2 = jax.random.normal(ks[3], (O, H), jnp.float32) * 0.2    # output conv
    b2 = jax.random.normal(ks[4], (O,), jnp.float32) * 0.1
    return (gamma, beta, w0, w1, b1, w2, b2)


if __name__ == "__main__":
    # Config: no_features=4, no_out_features=8, no_intermediate_features=32,
    #         no_layers=2 (=> input conv + 1 intermediate conv + output conv), do_initial_bn=True
    B, F, T = 2, 4, 16
    H, O = 32, 8

    key = jax.random.PRNGKey(0)
    kx, kp = jax.random.split(key)
    x = jax.random.normal(kx, (B, F, T), jnp.float32)
    params = init_params(kp, F, O, H)

    out = jax.block_until_ready(feature_aggregation_stack(x, params))
    ref = jax.block_until_ready(_reference(x, params))

    assert out.shape == (B, O, T), out.shape
    # bf16 matmul operands (f32 accumulation) => loosened tolerance vs the f32 reference.
    assert jnp.allclose(out, ref, atol=5e-2, rtol=5e-2), float(jnp.max(jnp.abs(out - ref)))
    print("KERNEL_OK")
</pallas_src>

<mosaic_0001>
module attributes {stable_mosaic.version = 11 : i64} {
  func.func @_fas_kernel(%arg0: i32, %arg1: i32, %arg2: memref<1x4x128xf32, #tpu.memory_space<vmem>>, %arg3: memref<32x4xbf16, #tpu.memory_space<vmem>>, %arg4: memref<32x1xf32, #tpu.memory_space<vmem>>, %arg5: memref<32x32xbf16, #tpu.memory_space<vmem>>, %arg6: memref<32x1xf32, #tpu.memory_space<vmem>>, %arg7: memref<8x32xbf16, #tpu.memory_space<vmem>>, %arg8: memref<8x1xf32, #tpu.memory_space<vmem>>, %arg9: memref<1x8x128xf32, #tpu.memory_space<vmem>>) attributes {dimension_semantics = [#tpu.dimension_semantics<parallel>, #tpu.dimension_semantics<parallel>], iteration_bounds = array<i64: 2, 1>, scalar_prefetch = 0 : i64, scratch_operands = 0 : i64, tpu.core_type = #tpu.core_type<tc>, window_params = [{transform_indices = @transform_0, window_bounds = array<i64: 1, 4, 128>}, {pipeline_mode = #tpu.pipeline_mode<synchronous>, transform_indices = @transform_1, window_bounds = array<i64: 32, 4>}, {pipeline_mode = #tpu.pipeline_mode<synchronous>, transform_indices = @transform_2, window_bounds = array<i64: 32, 1>}, {pipeline_mode = #tpu.pipeline_mode<synchronous>, transform_indices = @transform_3, window_bounds = array<i64: 32, 32>}, {pipeline_mode = #tpu.pipeline_mode<synchronous>, transform_indices = @transform_4, window_bounds = array<i64: 32, 1>}, {pipeline_mode = #tpu.pipeline_mode<synchronous>, transform_indices = @transform_5, window_bounds = array<i64: 8, 32>}, {pipeline_mode = #tpu.pipeline_mode<synchronous>, transform_indices = @transform_6, window_bounds = array<i64: 8, 1>}, {transform_indices = @transform_7, window_bounds = array<i64: 1, 8, 128>}]} {
    %c0 = arith.constant 0 : index
    %c0_0 = arith.constant 0 : index
    %c0_1 = arith.constant 0 : index
    %0 = vector.load %arg2[%c0, %c0_0, %c0_1] : memref<1x4x128xf32, #tpu.memory_space<vmem>>, vector<1x4x128xf32>
    %1 = vector.shape_cast %0 : vector<1x4x128xf32> to vector<4x128xf32>
    %2 = arith.truncf %1 : vector<4x128xf32> to vector<4x128xbf16>
    %c0_2 = arith.constant 0 : index
    %c0_3 = arith.constant 0 : index
    %3 = vector.load %arg3[%c0_2, %c0_3] : memref<32x4xbf16, #tpu.memory_space<vmem>>, vector<32x4xbf16>
    %cst = arith.constant dense<0.000000e+00> : vector<32x128xf32>
    %4 = tpu.matmul %3, %2, %cst {dimension_numbers = #tpu.dot_dimension_numbers<[1], [0], [0], [1], [0, 0, 1, 1], [], []>} : vector<32x4xbf16>, vector<4x128xbf16>, vector<32x128xf32> -> vector<32x128xf32>
    %c0_4 = arith.constant 0 : index
    %c0_5 = arith.constant 0 : index
    %5 = vector.load %arg4[%c0_4, %c0_5] : memref<32x1xf32, #tpu.memory_space<vmem>>, vector<32x1xf32>
    %6 = vector.broadcast %5 : vector<32x1xf32> to vector<32x128xf32>
    %7 = arith.addf %4, %6 : vector<32x128xf32>
    %cst_6 = arith.constant 0.000000e+00 : f32
    %8 = vector.broadcast %cst_6 : f32 to vector<32x128xf32>
    %9 = arith.cmpf ogt, %7, %8 : vector<32x128xf32>
    %cst_7 = arith.constant 0.00999999977 : f32
    %10 = vector.broadcast %cst_7 : f32 to vector<32x128xf32>
    %11 = arith.mulf %10, %7 : vector<32x128xf32>
    %12 = arith.select %9, %7, %11 : vector<32x128xi1>, vector<32x128xf32>
    %13 = arith.truncf %12 : vector<32x128xf32> to vector<32x128xbf16>
    %c0_8 = arith.constant 0 : index
    %c0_9 = arith.constant 0 : index
    %14 = vector.load %arg5[%c0_8, %c0_9] : memref<32x32xbf16, #tpu.memory_space<vmem>>, vector<32x32xbf16>
    %cst_10 = arith.constant dense<0.000000e+00> : vector<32x128xf32>
    %15 = tpu.matmul %14, %13, %cst_10 {dimension_numbers = #tpu.dot_dimension_numbers<[1], [0], [0], [1], [0, 0, 1, 1], [], []>} : vector<32x32xbf16>, vector<32x128xbf16>, vector<32x128xf32> -> vector<32x128xf32>
    %c0_11 = arith.constant 0 : index
    %c0_12 = arith.constant 0 : index
    %16 = vector.load %arg6[%c0_11, %c0_12] : memref<32x1xf32, #tpu.memory_space<vmem>>, vector<32x1xf32>
    %17 = vector.broadcast %16 : vector<32x1xf32> to vector<32x128xf32>
    %18 = arith.addf %15, %17 : vector<32x128xf32>
    %cst_13 = arith.constant 0.000000e+00 : f32
    %19 = vector.broadcast %cst_13 : f32 to vector<32x128xf32>
    %20 = arith.cmpf ogt, %18, %19 : vector<32x128xf32>
    %cst_14 = arith.constant 0.00999999977 : f32
    %21 = vector.broadcast %cst_14 : f32 to vector<32x128xf32>
    %22 = arith.mulf %21, %18 : vector<32x128xf32>
    %23 = arith.select %20, %18, %22 : vector<32x128xi1>, vector<32x128xf32>
    %24 = arith.truncf %23 : vector<32x128xf32> to vector<32x128xbf16>
    %c0_15 = arith.constant 0 : index
    %c0_16 = arith.constant 0 : index
    %25 = vector.load %arg7[%c0_15, %c0_16] : memref<8x32xbf16, #tpu.memory_space<vmem>>, vector<8x32xbf16>
    %cst_17 = arith.constant dense<0.000000e+00> : vector<8x128xf32>
    %26 = tpu.matmul %25, %24, %cst_17 {dimension_numbers = #tpu.dot_dimension_numbers<[1], [0], [0], [1], [0, 0, 1, 1], [], []>} : vector<8x32xbf16>, vector<32x128xbf16>, vector<8x128xf32> -> vector<8x128xf32>
    %c0_18 = arith.constant 0 : index
    %c0_19 = arith.constant 0 : index
    %27 = vector.load %arg8[%c0_18, %c0_19] : memref<8x1xf32, #tpu.memory_space<vmem>>, vector<8x1xf32>
    %28 = vector.broadcast %27 : vector<8x1xf32> to vector<8x128xf32>
    %29 = arith.addf %26, %28 : vector<8x128xf32>
    %c0_20 = arith.constant 0 : index
    %c0_21 = arith.constant 0 : index
    %c0_22 = arith.constant 0 : index
    %30 = vector.load %arg9[%c0_20, %c0_21, %c0_22] : memref<1x8x128xf32, #tpu.memory_space<vmem>>, vector<1x8x128xf32>
    %31 = vector.shape_cast %30 : vector<1x8x128xf32> to vector<8x128xf32>
    %32 = vector.shape_cast %29 : vector<8x128xf32> to vector<1x8x128xf32>
    tpu.vector_store %arg9[%c0_20, %c0_21, %c0_22], %32 {strides = array<i32>} : memref<1x8x128xf32, #tpu.memory_space<vmem>>, vector<1x8x128xf32>,
    return
  }
  func.func @transform_0(%arg0: i32, %arg1: i32) -> (i32, i32, i32) {
    %c0_i32 = arith.constant 0 : i32
    %c0_i32_0 = arith.constant 0 : i32
    return %arg0, %c0_i32, %arg1 : i32, i32, i32
  }
  func.func @transform_1(%arg0: i32, %arg1: i32) -> (i32, i32) {
    %c0_i32 = arith.constant 0 : i32
    %c0_i32_0 = arith.constant 0 : i32
    %c0_i32_1 = arith.constant 0 : i32
    return %c0_i32, %c0_i32_0 : i32, i32
  }
  func.func @transform_2(%arg0: i32, %arg1: i32) -> (i32, i32) {
    %c0_i32 = arith.constant 0 : i32
    %c0_i32_0 = arith.constant 0 : i32
    %c0_i32_1 = arith.constant 0 : i32
    return %c0_i32, %c0_i32_0 : i32, i32
  }
  func.func @transform_3(%arg0: i32, %arg1: i32) -> (i32, i32) {
    %c0_i32 = arith.constant 0 : i32
    %c0_i32_0 = arith.constant 0 : i32
    %c0_i32_1 = arith.constant 0 : i32
    return %c0_i32, %c0_i32_0 : i32, i32
  }
  func.func @transform_4(%arg0: i32, %arg1: i32) -> (i32, i32) {
    %c0_i32 = arith.constant 0 : i32
    %c0_i32_0 = arith.constant 0 : i32
    %c0_i32_1 = arith.constant 0 : i32
    return %c0_i32, %c0_i32_0 : i32, i32
  }
  func.func @transform_5(%arg0: i32, %arg1: i32) -> (i32, i32) {
    %c0_i32 = arith.constant 0 : i32
    %c0_i32_0 = arith.constant 0 : i32
    %c0_i32_1 = arith.constant 0 : i32
    return %c0_i32, %c0_i32_0 : i32, i32
  }
  func.func @transform_6(%arg0: i32, %arg1: i32) -> (i32, i32) {
    %c0_i32 = arith.constant 0 : i32
    %c0_i32_0 = arith.constant 0 : i32
    %c0_i32_1 = arith.constant 0 : i32
    return %c0_i32, %c0_i32_0 : i32, i32
  }
  func.func @transform_7(%arg0: i32, %arg1: i32) -> (i32, i32, i32) {
    %c0_i32 = arith.constant 0 : i32
    %c0_i32_0 = arith.constant 0 : i32
    return %arg0, %c0_i32, %arg1 : i32, i32, i32
  }
}

</mosaic_0001>

<llo_original>
// kernel: tpu_custom_call.1
$region0: #{tpu_custom_call.1}
  #allocation0 [shape = 'u32[]', space=smem, size = 0x4, offset = 0x4, fixed_abs, tag = 'smem constant byte address 0x4 - core index']
  #allocation1 [shape = 'u32[72,128]{1,0:T(1,128)}', space=vmem, size = 0x9000, scoped, tag = 'internal scratch']
  %s0 = inlined_call_operand.vmem [shape: f32[2,4,128], index: 0, kind: input, shape index: {}]
  %s1 = inlined_call_operand.vmem [shape: bf16[32,4], index: 1, kind: input, shape index: {}]
  %s2 = inlined_call_operand.vmem [shape: f32[32,1], index: 2, kind: input, shape index: {}]
  %s3 = inlined_call_operand.vmem [shape: bf16[32,32], index: 3, kind: input, shape index: {}]
  %s4 = inlined_call_operand.vmem [shape: f32[32,1], index: 4, kind: input, shape index: {}]
  %s5 = inlined_call_operand.vmem [shape: bf16[8,32], index: 5, kind: input, shape index: {}]
  %s6 = inlined_call_operand.vmem [shape: f32[8,1], index: 6, kind: input, shape index: {}]
  %s7 = inlined_call_operand.hbm [shape: f32[2,8,128], index: 7, kind: output, shape index: {}]
  %s8 = sld [smem:[#allocation0]]
  $region61: #{tpu_custom_call.1} parent=0
    _
  %s10 = ssub.s32 1, %s8
  %s11 = scalar_select 0, %s10, %s8
  $region1: #{tpu_custom_call.1} parent=0
    #allocation2 [shape = 'u8[8192]{0}', space=vmem, size = 0x2000, scoped, tag = 'output window, operand 0']
    #allocation3 [shape = 's32[2]{0}', space=sflag, size = 0x8, scoped, tag = 'scoped memory for tpu_custom_call.1']
    %12 = vsyncpa [#allocation3], 0
    %s13 = scalar_lea.sflag [#allocation3], 1
    %14 = vsyncpa %s13, 0
    loop: start=0, step=1, limit=4
    $region2: #{tpu_custom_call.1} parent=1 // loop_pre_header
      _
    $region3: #{tpu_custom_call.1} parent=1 // loop_header
      %s16 = sphi 0, %s20
      %p17 = scmp.ge.s32.totalorder %s16, 4
      %s23 = sphi 0, %s35
      %s24 = sphi 0, %s31
      %s25 = sphi 0, %s23
      %s26 = sphi 0, %s24
      %s27 = sphi 0, %s25
      %s28 = sphi 0, %s26
      %s40 = sphi 0, %s42
      %s43 = sphi 0, %s40
      %s44 = sphi 0, %s43
      %s60 = sphi 0, %s44
      %s64 = sphi 0, %s64
      %s66 = sphi 0, %s64
      %s67 = sphi 0, %s66
      %s81 = sphi 0, %s67
      %s85 = sphi 0, %s85
      %s87 = sphi 0, %s85
      %s88 = sphi 0, %s87
      %s102 = sphi 0, %s88
      %s106 = sphi 0, %s106
      %s108 = sphi 0, %s106
      %s109 = sphi 0, %s108
      %s123 = sphi 0, %s109
      %s127 = sphi 0, %s127
      %s129 = sphi 0, %s127
      %s130 = sphi 0, %s129
      %s144 = sphi 0, %s130
      %s148 = sphi 0, %s148
      %s150 = sphi 0, %s148
      %s151 = sphi 0, %s150
      %s165 = sphi 0, %s151
      %s169 = sphi 0, %s169
      %s171 = sphi 0, %s169
      %s172 = sphi 0, %s171
      %s186 = sphi 0, %s172
      %s194 = sphi 0, %s196
      %s197 = sphi 0, %s194
      %s198 = sphi 0, %s197
      %s214 = sphi 0, %s198
    $region4: #{tpu_custom_call.1} parent=1 // loop_header_branch
      %19 = sbr.rel (%p17) target = $region8
    $region5: #{tpu_custom_call.1} parent=1 // loop_body
      %s21 = ssub.s32 %s16, 1
      %s22 = ssub.s32 %s16, 2
      %s29 = sadd.s32 1, %s24
      %p30 = scmp.ge.s32.totalorder %s29, 1
      %s31 = scalar_select %p30, 0, %s29
      %s32 = sadd.s32 1, %s23
      %s33 = scalar_select %p30, %s32, %s23
      %p34 = scmp.ge.s32.totalorder %s33, 2
      %s35 = scalar_select %p34, 0, %s33
      %s36 = ssub.s32 %s23, %s35
      %s37 = ssub.s32 %s24, %s31
      %s38 = sor.u32 %s36, %s37
      %p39 = scmp.eq.s32.totalorder %s38, 0
      %s41 = sadd.s32 %s40, 1
      %s42 = scalar_select %p39, %s40, %s41
      %p45 = pneg %p39
      %p46 = scmp.eq.s32.totalorder %s16, 1
      %p47 = por %p45, %p46
      %p48 = scmp.ne.s32.totalorder %s40, %s43
      %p49 = scmp.eq.s32.totalorder %s16, 0
      %p50 = por %p48, %p49
      %p51 = scmp.ne.s32.totalorder %s40, %s43
      %p52 = scmp.eq.s32.totalorder %s21, 1
      %p53 = por %p51, %p52
      %p54 = scmp.ne.s32.totalorder %s43, %s44
      %p55 = scmp.eq.s32.totalorder %s21, 0
      %p56 = por %p54, %p55
      %p57 = scmp.ne.s32.totalorder %s43, %s44
      %p58 = scmp.eq.s32.totalorder %s22, 1
      %p59 = por %p57, %p58
      %p61 = scmp.ne.s32.totalorder %s44, %s60
      %p62 = scmp.eq.s32.totalorder %s22, 0
      %p63 = por %p61, %p62
      %s65 = sadd.s32 %s64, 1
      %p68 = scmp.eq.s32.totalorder %s16, 1
      %p69 = scmp.ne.s32.totalorder %s64, %s66
      %p70 = scmp.eq.s32.totalorder %s16, 0
      %p71 = por %p69, %p70
      %p72 = scmp.ne.s32.totalorder %s64, %s66
      %p73 = scmp.eq.s32.totalorder %s21, 1
      %p74 = por %p72, %p73
      %p75 = scmp.ne.s32.totalorder %s66, %s67
      %p76 = scmp.eq.s32.totalorder %s21, 0
      %p77 = por %p75, %p76
      %p78 = scmp.ne.s32.totalorder %s66, %s67
      %p79 = scmp.eq.s32.totalorder %s22, 1
      %p80 = por %p78, %p79
      %p82 = scmp.ne.s32.totalorder %s67, %s81
      %p83 = scmp.eq.s32.totalorder %s22, 0
      %p84 = por %p82, %p83
      %s86 = sadd.s32 %s85, 1
      %p89 = scmp.eq.s32.totalorder %s16, 1
      %p90 = scmp.ne.s32.totalorder %s85, %s87
      %p91 = scmp.eq.s32.totalorder %s16, 0
      %p92 = por %p90, %p91
      %p93 = scmp.ne.s32.totalorder %s85, %s87
      %p94 = scmp.eq.s32.totalorder %s21, 1
      %p95 = por %p93, %p94
      %p96 = scmp.ne.s32.totalorder %s87, %s88
      %p97 = scmp.eq.s32.totalorder %s21, 0
      %p98 = por %p96, %p97
      %p99 = scmp.ne.s32.totalorder %s87, %s88
      %p100 = scmp.eq.s32.totalorder %s22, 1
      %p101 = por %p99, %p100
      %p103 = scmp.ne.s32.totalorder %s88, %s102
      %p104 = scmp.eq.s32.totalorder %s22, 0
      %p105 = por %p103, %p104
      %s107 = sadd.s32 %s106, 1
      %p110 = scmp.eq.s32.totalorder %s16, 1
      %p111 = scmp.ne.s32.totalorder %s106, %s108
      %p112 = scmp.eq.s32.totalorder %s16, 0
      %p113 = por %p111, %p112
      %p114 = scmp.ne.s32.totalorder %s106, %s108
      %p115 = scmp.eq.s32.totalorder %s21, 1
      %p116 = por %p114, %p115
      %p117 = scmp.ne.s32.totalorder %s108, %s109
      %p118 = scmp.eq.s32.totalorder %s21, 0
      %p119 = por %p117, %p118
      %p120 = scmp.ne.s32.totalorder %s108, %s109
      %p121 = scmp.eq.s32.totalorder %s22, 1
      %p122 = por %p120, %p121
      %p124 = scmp.ne.s32.totalorder %s109, %s123
      %p125 = scmp.eq.s32.totalorder %s22, 0
      %p126 = por %p124, %p125
      %s128 = sadd.s32 %s127, 1
      %p131 = scmp.eq.s32.totalorder %s16, 1
      %p132 = scmp.ne.s32.totalorder %s127, %s129
      %p133 = scmp.eq.s32.totalorder %s16, 0
      %p134 = por %p132, %p133
      %p135 = scmp.ne.s32.totalorder %s127, %s129
      %p136 = scmp.eq.s32.totalorder %s21, 1
      %p137 = por %p135, %p136
      %p138 = scmp.ne.s32.totalorder %s129, %s130
      %p139 = scmp.eq.s32.totalorder %s21, 0
      %p140 = por %p138, %p139
      %p141 = scmp.ne.s32.totalorder %s129, %s130
      %p142 = scmp.eq.s32.totalorder %s22, 1
      %p143 = por %p141, %p142
      %p145 = scmp.ne.s32.totalorder %s130, %s144
      %p146 = scmp.eq.s32.totalorder %s22, 0
      %p147 = por %p145, %p146
      %s149 = sadd.s32 %s148, 1
      %p152 = scmp.eq.s32.totalorder %s16, 1
      %p153 = scmp.ne.s32.totalorder %s148, %s150
      %p154 = scmp.eq.s32.totalorder %s16, 0
      %p155 = por %p153, %p154
      %p156 = scmp.ne.s32.totalorder %s148, %s150
      %p157 = scmp.eq.s32.totalorder %s21, 1
      %p158 = por %p156, %p157
      %p159 = scmp.ne.s32.totalorder %s150, %s151
      %p160 = scmp.eq.s32.totalorder %s21, 0
      %p161 = por %p159, %p160
      %p162 = scmp.ne.s32.totalorder %s150, %s151
      %p163 = scmp.eq.s32.totalorder %s22, 1
      %p164 = por %p162, %p163
      %p166 = scmp.ne.s32.totalorder %s151, %s165
      %p167 = scmp.eq.s32.totalorder %s22, 0
      %p168 = por %p166, %p167
      %s170 = sadd.s32 %s169, 1
      %p173 = scmp.eq.s32.totalorder %s16, 1
      %p174 = scmp.ne.s32.totalorder %s169, %s171
      %p175 = scmp.eq.s32.totalorder %s16, 0
      %p176 = por %p174, %p175
      %p177 = scmp.ne.s32.totalorder %s169, %s171
      %p178 = scmp.eq.s32.totalorder %s21, 1
      %p179 = por %p177, %p178
      %p180 = scmp.ne.s32.totalorder %s171, %s172
      %p181 = scmp.eq.s32.totalorder %s21, 0
      %p182 = por %p180, %p181
      %p183 = scmp.ne.s32.totalorder %s171, %s172
      %p184 = scmp.eq.s32.totalorder %s22, 1
      %p185 = por %p183, %p184
      %p187 = scmp.ne.s32.totalorder %s172, %s186
      %p188 = scmp.eq.s32.totalorder %s22, 0
      %p189 = por %p187, %p188
      %s190 = ssub.s32 %s23, %s35
      %s191 = ssub.s32 %s24, %s31
      %s192 = sor.u32 %s190, %s191
      %p193 = scmp.eq.s32.totalorder %s192, 0
      %s195 = sadd.s32 %s194, 1
      %s196 = scalar_select %p193, %s194, %s195
      %p199 = pneg %p193
      %p200 = scmp.eq.s32.totalorder %s16, 1
      %p201 = por %p199, %p200
      %p202 = scmp.ne.s32.totalorder %s194, %s197
      %p203 = scmp.eq.s32.totalorder %s16, 0
      %p204 = por %p202, %p203
      %p205 = scmp.ne.s32.totalorder %s194, %s197
      %p206 = scmp.eq.s32.totalorder %s21, 1
      %p207 = por %p205, %p206
      %p208 = scmp.ne.s32.totalorder %s197, %s198
      %p209 = scmp.eq.s32.totalorder %s21, 0
      %p210 = por %p208, %p209
      %p211 = scmp.ne.s32.totalorder %s197, %s198
      %p212 = scmp.eq.s32.totalorder %s22, 1
      %p213 = por %p211, %p212
      %p215 = scmp.ne.s32.totalorder %s198, %s214
      %p216 = scmp.eq.s32.totalorder %s22, 0
      %p217 = por %p215, %p216
      %p218 = scmp.le.s32.totalorder 1, %s16
      %p219 = scmp.lt.s32.totalorder %s16, 3
      %p220 = pnand %p218, %p219
      %p221 = pneg %p220
      // Predicated region
      $region9: #{tpu_custom_call.1} parent=5 // pred_check
        _
      $region10: #{tpu_custom_call.1} parent=5 // pred_check_branch
        %223 = sbr.rel (%p220) target = $region12
      $region11: #{tpu_custom_call.1} parent=5 // pred_region
        %s224 = ssub.s32 %s16, 1
        // Predicated region
        $region13: #{tpu_custom_call.1} parent=11 // pred_check
          %p225 = pneg %p77
        $region14: #{tpu_custom_call.1} parent=11 // pred_check_branch
          %227 = sbr.rel (%p225) target = $region16
        $region15: #{tpu_custom_call.1} parent=11 // pred_region
          _
        $region16: #{tpu_custom_call.1} parent=11 // pred_fallthru
          _
        // Predicated region
        $region17: #{tpu_custom_call.1} parent=11 // pred_check
          %p228 = pneg %p98
        $region18: #{tpu_custom_call.1} parent=11 // pred_check_branch
          %230 = sbr.rel (%p228) target = $region20
        $region19: #{tpu_custom_call.1} parent=11 // pred_region
          _
        $region20: #{tpu_custom_call.1} parent=11 // pred_fallthru
          _
        // Predicated region
        $region21: #{tpu_custom_call.1} parent=11 // pred_check
          %p231 = pneg %p119
        $region22: #{tpu_custom_call.1} parent=11 // pred_check_branch
          %233 = sbr.rel (%p231) target = $region24
        $region23: #{tpu_custom_call.1} parent=11 // pred_region
          _
        $region24: #{tpu_custom_call.1} parent=11 // pred_fallthru
          _
        // Predicated region
        $region25: #{tpu_custom_call.1} parent=11 // pred_check
          %p234 = pneg %p140
        $region26: #{tpu_custom_call.1} parent=11 // pred_check_branch
          %236 = sbr.rel (%p234) target = $region28
        $region27: #{tpu_custom_call.1} parent=11 // pred_region
          _
        $region28: #{tpu_custom_call.1} parent=11 // pred_fallthru
          _
        // Predicated region
        $region29: #{tpu_custom_call.1} parent=11 // pred_check
          %p237 = pneg %p161
        $region30: #{tpu_custom_call.1} parent=11 // pred_check_branch
          %239 = sbr.rel (%p237) target = $region32
        $region31: #{tpu_custom_call.1} parent=11 // pred_region
          _
        $region32: #{tpu_custom_call.1} parent=11 // pred_fallthru
          _
        // Predicated region
        $region33: #{tpu_custom_call.1} parent=11 // pred_check
          %p240 = pneg %p182
        $region34: #{tpu_custom_call.1} parent=11 // pred_check_branch
          %242 = sbr.rel (%p240) target = $region36
        $region35: #{tpu_custom_call.1} parent=11 // pred_region
          _
        $region36: #{tpu_custom_call.1} parent=11 // pred_fallthru
          _
      $region12: #{tpu_custom_call.1} parent=5 // pred_fallthru
        _
      %p243 = scmp.lt.s32.totalorder %s16, 2
      // Predicated region
      $region37: #{tpu_custom_call.1} parent=5 // pred_check
        %p244 = pneg %p243
      $region38: #{tpu_custom_call.1} parent=5 // pred_check_branch
        %246 = sbr.rel (%p244) target = $region40
      $region39: #{tpu_custom_call.1} parent=5 // pred_region
        // Predicated region
        $region41: #{tpu_custom_call.1} parent=39 // pred_check
          %p247 = pneg %p50
        $region42: #{tpu_custom_call.1} parent=39 // pred_check_branch
          %249 = sbr.rel (%p247) target = $region44
        $region43: #{tpu_custom_call.1} parent=39 // pred_region
          %p250 = scmp.lt.s32.totalorder %s23, 1
          %s251 = scalar_select %p250, %s23, 1
          %p252 = scmp.lt.s32.totalorder %s24, 0
          %s253 = scalar_select %p252, %s24, 0
          %s254 = sadd.s32 %s253, %s251
          %s255 = smul.addr %s254, 4
          %s256 = scalar_lea.vmem %s0, %s255
        $region44: #{tpu_custom_call.1} parent=39 // pred_fallthru
          _
      $region40: #{tpu_custom_call.1} parent=5 // pred_fallthru
        _
      %p257 = scmp.le.s32.totalorder 1, %s16
      %p258 = scmp.lt.s32.totalorder %s16, 3
      %p259 = pnand %p257, %p258
      %p260 = pneg %p259
      // Predicated region
      $region45: #{tpu_custom_call.1} parent=5 // pred_check
        _
      $region46: #{tpu_custom_call.1} parent=5 // pred_check_branch
        %262 = sbr.rel (%p259) target = $region48
      $region47: #{tpu_custom_call.1} parent=5 // pred_region
        %s263 = ssub.s32 %s16, 1
        %p264 = scmp.lt.s32.totalorder %s25, 1
        %s265 = scalar_select %p264, %s25, 1
        %p266 = scmp.lt.s32.totalorder %s26, 0
        %s267 = scalar_select %p266, %s26, 0
        %s268 = sadd.s32 %s267, %s265
        %s269 = smul.addr %s268, 4
        %s270 = scalar_lea.vmem %s0, %s269
        %p271 = pneg %p56
        %p272 = pneg %p53
        %p273 = pneg %p77
        %p274 = pneg %p74
        %p275 = pneg %p98
        %p276 = pneg %p95
        %p277 = pneg %p119
        %p278 = pneg %p116
        %p279 = pneg %p140
        %p280 = pneg %p137
        %p281 = pneg %p161
        %p282 = pneg %p158
        %p283 = pneg %p182
        %p284 = pneg %p179
        %p285 = pneg %p210
        %p286 = pneg %p207
        %s287 = sand.u32 %s197, 1
        %s288 = scalar_lea.sflag [#allocation3], %s287
        %s289 = sand.u32 %s197, 1
        %s290 = smul.addr %s289, 8
        %s291 = scalar_lea.vmem [#allocation2], %s290
        %p292 = scmp.lt.s32.totalorder %s25, 1
        %s293 = scalar_select %p292, %s25, 1
        %p294 = scmp.lt.s32.totalorder %s26, 0
        %s295 = scalar_select %p294, %s26, 0
        %s296 = sadd.s32 %s295, %s293
        %s297 = smul.addr %s296, 4
        %s298 = scalar_lea.vmem %s0, %s297
        %v300 = vld [vmem:[%s298] sm:$0xf]
        %v301 = vpack.c.bf16 %v300, %v300
        %v302 = vld [vmem:[%s1] sm:$0xf]
        %v303 = vld [vmem:[%s1 + $0x4] sm:$0xf]
        %v304 = vld [vmem:[%s1 + $0x8] sm:$0xf]
        %v305 = vld [vmem:[%s1 + $0xc] sm:$0xf]
        %v306 = vld [vmem:[%s2] sm:$0xff]
        %v307 = vld [vmem:[%s2 + $0x8] sm:$0xff]
        %v308 = vld [vmem:[%s2 + $0x10] sm:$0xff]
        %v309 = vld [vmem:[%s2 + $0x18] sm:$0xff]
        %311 = vset.pattern.permute.xlu0 0
        %312 = vperm.xlu0 %311, %v306
        %v313 = vpop.permute.xlu0 %312
        %316 = vset.pattern.permute.xlu0 0
        %317 = vperm.xlu0 %316, %v307
        %v318 = vpop.permute.xlu0 %317
        %321 = vset.pattern.permute.xlu0 0
        %322 = vperm.xlu0 %321, %v308
        %v323 = vpop.permute.xlu0 %322
        %326 = vset.pattern.permute.xlu0 0
        %327 = vperm.xlu0 %326, %v309
        %v328 = vpop.permute.xlu0 %327
        %v334 = vunpack.c.l.b16 %v302
        %v335 = vunpack.c.l.b16 %v303
        %v336 = vunpack.c.l.b16 %v304
        %v337 = vunpack.c.l.b16 %v305
        %v338 = vpack.c.b16 %v335, %v334
        %v339 = vpack.c.b16 %v337, %v336
        %vm340 = vcmask 31744
        %v342 = vsel %vm340, %v338, 0
        %v345 = vsel %vm340, %v339, 0
        %vm347 = vcmask 1041408
        %v349 = vsel %vm347, %v301, 0
        %351 = vmatpush.bf16.msra.mxu0 0
        %352 = vmatpush.bf16.msra.mxu0 0
        %353 = vmatpush.bf16.msra.mxu0 0
        %354 = vmatpush.bf16.msra.mxu0 0
        %355 = vmatpush.bf16.msra.mxu0 0
        %356 = vmatpush.bf16.msra.mxu0 0
        %357 = vmatpush.bf16.msra.mxu0 0
        %358 = vmatpush.bf16.msra.mxu0 %v349
        %359 = vmatmul.bf16.gmra.mxu0 %v342
        %v360 = vpop.f32.mrf.mxu0
        %v361 = vadd.f32 %v313, %v360
        %v362 = vpop.f32.mrf.mxu0
        %v363 = vadd.f32 %v318, %v362
        %364 = vmatmul.bf16.gmra.mxu0 %v345
        %v365 = vpop.f32.mrf.mxu0
        %v366 = vadd.f32 %v323, %v365
        %v367 = vpop.f32.mrf.mxu0
        %v368 = vadd.f32 %v328, %v367
        %369 = vdwg.mxu0
        %vm370 = vcmp.gt.f32.partialorder %v361, 0.0
        %vm371 = vcmp.gt.f32.partialorder %v363, 0.0
        %vm372 = vcmp.gt.f32.partialorder %v366, 0.0
        %vm373 = vcmp.gt.f32.partialorder %v368, 0.0
        %v374 = vmul.f32 %v361, 0.01
        %v375 = vmul.f32 %v363, 0.01
        %v376 = vmul.f32 %v366, 0.01
        %v377 = vmul.f32 %v368, 0.01
        %v378 = vsel %vm370, %v361, %v374
        %v379 = vsel %vm371, %v363, %v375
        %v380 = vsel %vm372, %v366, %v376
        %v381 = vsel %vm373, %v368, %v377
        %v382 = vpack.c.bf16 %v379, %v378
        %v383 = vpack.c.bf16 %v381, %v380
        %v384 = vld [vmem:[%s3] sm:$0xf]
        %v385 = vld [vmem:[%s3 + $0x4] sm:$0xf]
        %v386 = vld [vmem:[%s3 + $0x8] sm:$0xf]
        %v387 = vld [vmem:[%s3 + $0xc] sm:$0xf]
        %v388 = vld [vmem:[%s4] sm:$0xff]
        %v389 = vld [vmem:[%s4 + $0x8] sm:$0xff]
        %v390 = vld [vmem:[%s4 + $0x10] sm:$0xff]
        %v391 = vld [vmem:[%s4 + $0x18] sm:$0xff]
        %393 = vset.pattern.permute.xlu0 0
        %394 = vperm.xlu0 %393, %v388
        %v395 = vpop.permute.xlu0 %394
        %398 = vset.pattern.permute.xlu0 0
        %399 = vperm.xlu0 %398, %v389
        %v400 = vpop.permute.xlu0 %399
        %403 = vset.pattern.permute.xlu0 0
        %404 = vperm.xlu0 %403, %v390
        %v405 = vpop.permute.xlu0 %404
        %408 = vset.pattern.permute.xlu0 0
        %409 = vperm.xlu0 %408, %v391
        %v410 = vpop.permute.xlu0 %409
        %v416 = vunpack.c.l.b16 %v384
        %v417 = vunpack.c.l.b16 %v385
        %v418 = vunpack.c.l.b16 %v386
        %v419 = vunpack.c.l.b16 %v387
        %v420 = vpack.c.b16 %v417, %v416
        %v421 = vpack.c.b16 %v419, %v418
        %vm422 = vcmask 261120
        %v424 = vsel %vm422, %v420, 0
        %v427 = vsel %vm422, %v421, 0
        %429 = vmatpush.bf16.msra.mxu0 0
        %430 = vmatpush.bf16.msra.mxu0 0
        %431 = vmatpush.bf16.msra.mxu0 0
        %432 = vmatpush.bf16.msra.mxu0 0
        %433 = vmatpush.bf16.msra.mxu0 0
        %434 = vmatpush.bf16.msra.mxu0 0
        %435 = vmatpush.bf16.msra.mxu0 %v383
        %436 = vmatpush.bf16.msra.mxu0 %v382
        %437 = vmatmul.bf16.gmra.mxu0 %v424
        %v438 = vpop.f32.mrf.mxu0
        %v439 = vadd.f32 %v395, %v438
        %v440 = vpop.f32.mrf.mxu0
        %v441 = vadd.f32 %v400, %v440
        %442 = vmatmul.bf16.gmra.mxu0 %v427
        %v443 = vpop.f32.mrf.mxu0
        %v444 = vadd.f32 %v405, %v443
        %v445 = vpop.f32.mrf.mxu0
        %v446 = vadd.f32 %v410, %v445
        %447 = vdwg.mxu0
        %vm448 = vcmp.gt.f32.partialorder %v439, 0.0
        %vm449 = vcmp.gt.f32.partialorder %v441, 0.0
        %vm450 = vcmp.gt.f32.partialorder %v444, 0.0
        %vm451 = vcmp.gt.f32.partialorder %v446, 0.0
        %v452 = vmul.f32 %v439, 0.01
        %v453 = vmul.f32 %v441, 0.01
        %v454 = vmul.f32 %v444, 0.01
        %v455 = vmul.f32 %v446, 0.01
        %v456 = vsel %vm448, %v439, %v452
        %v457 = vsel %vm449, %v441, %v453
        %v458 = vsel %vm450, %v444, %v454
        %v459 = vsel %vm451, %v446, %v455
        %v460 = vpack.c.bf16 %v457, %v456
        %v461 = vpack.c.bf16 %v459, %v458
        %v462 = vld [vmem:[%s5] sm:$0xf]
        %v463 = vld [vmem:[%s6] sm:$0xff]
        %465 = vset.pattern.permute.xlu0 0
        %466 = vperm.xlu0 %465, %v463
        %v467 = vpop.permute.xlu0 %466
        %v470 = vsel %vm422, %v462, 0
        %472 = vmatpush.bf16.msra.mxu0 0
        %473 = vmatpush.bf16.msra.mxu0 0
        %474 = vmatpush.bf16.msra.mxu0 0
        %475 = vmatpush.bf16.msra.mxu0 0
        %476 = vmatpush.bf16.msra.mxu0 0
        %477 = vmatpush.bf16.msra.mxu0 0
        %478 = vmatpush.bf16.msra.mxu0 %v461
        %479 = vmatpush.bf16.msra.mxu0 %v460
        %480 = vmatmul.bf16.gmra.mxu0 %v470
        %v481 = vpop.f32.mrf.mxu0
        %v482 = vadd.f32 %v467, %v481
        %v483 = vpop.f32.mrf.mxu0
        %484 = vdwg.mxu0
        %485 = vst [vmem:[%s291] sm:$0xff] %v482
        %s486 = sand.u32 %s197, 1
        %s487 = scalar_lea.sflag [#allocation3], %s486
        %s488 = sand.u32 %s197, 1
        %s489 = smul.addr %s488, 8
        %s490 = scalar_lea.vmem [#allocation2], %s489
        // Predicated region
        $region49: #{tpu_custom_call.1} parent=47 // pred_check
          %p491 = pneg %p207
        $region50: #{tpu_custom_call.1} parent=47 // pred_check_branch
          %493 = sbr.rel (%p491) target = $region52
        $region51: #{tpu_custom_call.1} parent=47 // pred_region
          %495 = vsyncadd %s487, 0
          %s496 = sadd.s32 %s26, %s25
          %s497 = smul.addr %s496, 8
          %s498 = scalar_lea.hbm %s7, %s497
          %s500 = sshll.u32 %s490, 4
          %s501 = int_to_ptr.vmem [resolvable:$true] %s500
          %s502 = sshll.u32 %s498, 4
          %s503 = int_to_ptr.hbm [resolvable:$true] %s502
          %505 = dma.vmem_to_hbm [thread:$0]  %s501, 128, %s503, %s487
        $region52: #{tpu_custom_call.1} parent=47 // pred_fallthru
          _
      $region48: #{tpu_custom_call.1} parent=5 // pred_fallthru
        _
      %p506 = scmp.le.s32.totalorder 2, %s16
      // Predicated region
      $region53: #{tpu_custom_call.1} parent=5 // pred_check
        %p507 = pneg %p506
      $region54: #{tpu_custom_call.1} parent=5 // pred_check_branch
        %509 = sbr.rel (%p507) target = $region56
      $region55: #{tpu_custom_call.1} parent=5 // pred_region
        %s510 = ssub.s32 %s16, 2
        // Predicated region
        $region57: #{tpu_custom_call.1} parent=55 // pred_check
          %p511 = pneg %p213
        $region58: #{tpu_custom_call.1} parent=55 // pred_check_branch
          %513 = sbr.rel (%p511) target = $region60
        $region59: #{tpu_custom_call.1} parent=55 // pred_region
          %s514 = sand.u32 %s198, 1
          %s515 = scalar_lea.sflag [#allocation3], %s514
          %s516 = sand.u32 %s198, 1
          %s517 = smul.addr %s516, 8
          %s518 = scalar_lea.vmem [#allocation2], %s517
          %520 = dma.done %s515, 128
        $region60: #{tpu_custom_call.1} parent=55 // pred_fallthru
          _
      $region56: #{tpu_custom_call.1} parent=5 // pred_fallthru
        _
    $region6: #{tpu_custom_call.1} parent=1 // loop_footer
      %s20 = sadd.s32 1, %s16
    $region7: #{tpu_custom_call.1} parent=1 // loop_footer_branch
      %15 = sbr.rel target = $region3
    $region8: #{tpu_custom_call.1} parent=1 // loop_exit
      _
    %521 = vsyncpa [#allocation3], 1
    %s522 = scalar_lea.sflag [#allocation3], 1
    %523 = vsyncpa %s522, 1

</llo_original>
